<compile_context>
chip_gen: v5e
topology: v5e:2x2
jax: 0.10.0
libtpu: 0.0.40
codegen_flags: <defaults>
</compile_context>

<pallas_src>
import functools

import jax
import jax.numpy as jnp
from jax import lax
from jax.experimental import pallas as pl
from jax.experimental.pallas import tpu as pltpu


def _round_up(x, m):
    return ((x + m - 1) // m) * m


def dora_kernel(x_ref, w_ref, bias_ref, a_ref, b_ref, g_ref, m_ref, o_ref,
                acc_lin, acc_xa, xa_s, *, alpha, eps):
    j = pl.program_id(1)          # out_features tile index
    k = pl.program_id(2)          # in_features (reduction) tile index
    nk = pl.num_programs(2)

    @pl.when(k == 0)
    def _init_lin():
        # Fold the bias into the accumulator init (one less epilogue add).
        acc_lin[...] = jnp.broadcast_to(bias_ref[...], acc_lin.shape)

    @pl.when((k == 0) & (j == 0))
    def _init_xa():
        acc_xa[...] = jnp.zeros_like(acc_xa)

    x = x_ref[...]                                            # (TB, TK) bf16
    # Frozen linear path: x @ W.T  (W kept in (OUT, IN) layout; contract dim 1
    # of both operands -> no transpose copy of the weight anywhere).
    acc_lin[...] += lax.dot_general(
        x, w_ref[...], (((1,), (1,)), ((), ())),
        preferred_element_type=jnp.float32)                   # (TB, TO) f32

    # xa = x @ A is identical for every OUT tile: accumulate it only on the
    # j == 0 pass and reuse the scratch for j > 0.
    @pl.when(j == 0)
    def _acc_xa():
        acc_xa[...] += jnp.dot(x, a_ref[...],
                               preferred_element_type=jnp.float32)  # (TB, Rp)

    @pl.when(k == nk - 1)
    def _finalize():
        @pl.when(j == 0)
        def _scale_xa():
            # Row L2 norm over the FULL out_features via the rank-space Gram
            # matrix:  ||alpha * xa @ B||^2 = xa @ (alpha^2 * B @ B.T) @ xa^T.
            xa = acc_xa[...]                                  # (TB, Rp) f32
            xg = jnp.dot(xa, g_ref[...],
                         preferred_element_type=jnp.float32)  # (TB, Rp)
            sumsq = jnp.sum(xg * xa, axis=1, keepdims=True)   # (TB, 1)
            norm = jnp.sqrt(jnp.maximum(sumsq, 0.0))
            inv = pl.reciprocal(norm + eps, approx=True)      # EUP, (TB, 1)
            # Fold alpha and 1/(norm+eps) into xa once per batch tile; then
            # m * lora_norm == m * (xa_s @ B) for every OUT tile.
            xa_s[...] = (alpha * inv * xa).astype(xa_s.dtype)

        lora_n = jnp.dot(xa_s[...], b_ref[...],
                         preferred_element_type=jnp.float32)  # (TB, TO)
        o_ref[...] = (acc_lin[...] + m_ref[...] * lora_n).astype(o_ref.dtype)


def linear_with_dora(x, w, b, A, B, m, *, alpha, eps=1e-9,
                     block_b=256, block_out=256, block_in=512):
    """x: (N, IN); w: (OUT, IN) PyTorch layout; b: (OUT,); A: (IN, R);
    B: (R, OUT); m: (1, OUT).  Returns (N, OUT) in x.dtype."""
    N, IN = x.shape
    OUT, IN_w = w.shape
    R = A.shape[1]
    assert IN_w == IN and B.shape == (R, OUT) and m.shape[-1] == OUT

    # ---- tile sizes: lane-dense, MXU-friendly, clipped for small problems ----
    Rp = max(128, _round_up(R, 128))               # lane-dense rank
    TB = min(block_b, _round_up(N, 8))             # batch tile (sublane mult.)
    TO = min(block_out, _round_up(OUT, 128))       # out_features tile
    TK = min(block_in, _round_up(IN, 128))         # in_features (reduction) tile
    Np, OUTp, INp = _round_up(N, TB), _round_up(OUT, TO), _round_up(IN, TK)
    nk = INp // TK

    out_dtype = x.dtype
    cdt = jnp.bfloat16                             # MXU input dtype (frozen wts)

    # ---- zero-padded operands (padding is exact for every path) ----
    x_p = jnp.pad(x, ((0, Np - N), (0, INp - IN))).astype(cdt)
    w_p = jnp.pad(w, ((0, OUTp - OUT), (0, INp - IN))).astype(cdt)   # (OUTp, INp)
    a_p = jnp.pad(A, ((0, INp - IN), (0, Rp - R))).astype(cdt)
    b_p = jnp.pad(B, ((0, Rp - R), (0, OUTp - OUT))).astype(cdt)
    bias_p = jnp.pad(b.reshape(1, OUT).astype(jnp.float32),
                     ((0, 0), (0, OUTp - OUT)))
    m_p = jnp.pad(m.reshape(1, OUT).astype(jnp.float32),
                  ((0, 0), (0, OUTp - OUT)))
    Bf = B.astype(jnp.float32)
    g_p = jnp.pad((alpha * alpha) * (Bf @ Bf.T),                      # (Rp, Rp) f32
                  ((0, Rp - R), (0, Rp - R)))

    grid = (Np // TB, OUTp // TO, nk)

    # A is only consumed on the j == 0 pass; pin its block index for j > 0 so
    # the pipeline elides the (unused) re-fetch of the A tiles.
    def a_index(i, j, k):
        return (jnp.where(j == 0, k, nk - 1), 0)

    # ---- VMEM budget from the chosen tiles (2 pipeline buffers per operand) ----
    bfb, f32b = 2, 4
    out_b = jnp.dtype(out_dtype).itemsize
    vmem_est = (2 * TB * TK * bfb          # x
                + 2 * TO * TK * bfb        # W
                + 2 * TK * Rp * bfb        # A
                + 2 * Rp * TO * bfb        # B
                + 2 * Rp * Rp * f32b       # G
                + 2 * 2 * 8 * TO * f32b    # bias + m (sublane-padded)
                + 2 * TB * TO * out_b      # out
                + TB * TO * f32b + TB * Rp * f32b + TB * Rp * bfb)  # scratch
    vmem_limit = min(64 * 1024 * 1024,
                     max(32 * 1024 * 1024, int(vmem_est * 2)))

    kernel = functools.partial(dora_kernel, alpha=float(alpha), eps=float(eps))

    out_p = pl.pallas_call(
        kernel,
        out_shape=jax.ShapeDtypeStruct((Np, OUTp), out_dtype),
        grid_spec=pltpu.PrefetchScalarGridSpec(
            num_scalar_prefetch=0,
            grid=grid,
            in_specs=[
                pl.BlockSpec((TB, TK), lambda i, j, k: (i, k)),   # x
                pl.BlockSpec((TO, TK), lambda i, j, k: (j, k)),   # W (OUT, IN)
                pl.BlockSpec((1, TO), lambda i, j, k: (0, j)),    # bias
                pl.BlockSpec((TK, Rp), a_index),                  # A
                pl.BlockSpec((Rp, TO), lambda i, j, k: (0, j)),   # B
                pl.BlockSpec((Rp, Rp), lambda i, j, k: (0, 0)),   # G = a^2 B B^T
                pl.BlockSpec((1, TO), lambda i, j, k: (0, j)),    # m
            ],
            out_specs=pl.BlockSpec((TB, TO), lambda i, j, k: (i, j)),
            scratch_shapes=[pltpu.VMEM((TB, TO), jnp.float32),    # linear acc
                            pltpu.VMEM((TB, Rp), jnp.float32),    # xa acc
                            pltpu.VMEM((TB, Rp), jnp.bfloat16)],  # scaled xa
        ),
        compiler_params=pltpu.CompilerParams(
            # OUT axis must stay on the same core as its batch tile (xa reuse),
            # so only the batch axis is megacore-parallel.
            dimension_semantics=("parallel", "arbitrary", "arbitrary"),
            vmem_limit_bytes=vmem_limit),
    )(x_p, w_p, bias_p, a_p, b_p, g_p, m_p)

    return out_p[:N, :OUT]


def reference(x, w, b, A, B, m, alpha):
    linear_out = x @ w.T + b
    lora_out = alpha * (x @ A @ B)
    norm = jnp.linalg.norm(lora_out, axis=1, keepdims=True)
    lora_norm = lora_out / (norm + 1e-9)
    return linear_out + m * lora_norm


if __name__ == "__main__":
    # Small shapes consistent with nn.Linear(in_features=32, out_features=32).
    N, IN, OUT, RANK = 16, 32, 32, 4
    ALPHA = 2.0

    key = jax.random.PRNGKey(0)
    kx, kw, kb, ka, kbb = jax.random.split(key, 5)

    x = jax.random.normal(kx, (N, IN), dtype=jnp.float32)
    w = jax.random.normal(kw, (OUT, IN), dtype=jnp.float32) * 0.1   # frozen weight
    b = jax.random.normal(kb, (OUT,), dtype=jnp.float32) * 0.1      # frozen bias
    # LoRA params (module init has B = zeros; use nonzero B to exercise the
    # normalization / magnitude path).
    A = jax.random.uniform(ka, (IN, RANK), dtype=jnp.float32) / jnp.sqrt(RANK)
    B = jax.random.normal(kbb, (RANK, OUT), dtype=jnp.float32) * 0.05
    m = jnp.ones((1, OUT), dtype=jnp.float32)                       # DoRA magnitude

    out = linear_with_dora(x, w, b, A, B, m, alpha=ALPHA)
    out = jax.block_until_ready(out)

    ref = reference(x, w, b, A, B, m, ALPHA)
    assert out.shape == (N, OUT)
    # bf16 MXU inputs + approx reciprocal -> loosened tolerance vs f32 reference.
    assert jnp.allclose(out, ref, atol=3e-2, rtol=3e-2), "mismatch vs reference"

    print("KERNEL_OK")
</pallas_src>

<mosaic_0001>
module attributes {stable_mosaic.version = 11 : i64} {
  func.func @dora_kernel(%arg0: i32, %arg1: i32, %arg2: i32, %arg3: memref<16x128xbf16, #tpu.memory_space<vmem>>, %arg4: memref<128x128xbf16, #tpu.memory_space<vmem>>, %arg5: memref<1x128xf32, #tpu.memory_space<vmem>>, %arg6: memref<128x128xbf16, #tpu.memory_space<vmem>>, %arg7: memref<128x128xbf16, #tpu.memory_space<vmem>>, %arg8: memref<128x128xf32, #tpu.memory_space<vmem>>, %arg9: memref<1x128xf32, #tpu.memory_space<vmem>>, %arg10: memref<16x128xf32, #tpu.memory_space<vmem>>, %arg11: memref<16x128xf32, #tpu.memory_space<vmem>>, %arg12: memref<16x128xf32, #tpu.memory_space<vmem>>, %arg13: memref<16x128xbf16, #tpu.memory_space<vmem>>) attributes {dimension_semantics = [#tpu.dimension_semantics<parallel>, #tpu.dimension_semantics<arbitrary>, #tpu.dimension_semantics<arbitrary>], iteration_bounds = array<i64: 1, 1, 1>, scalar_prefetch = 0 : i64, scratch_operands = 3 : i64, tpu.core_type = #tpu.core_type<tc>, window_params = [{transform_indices = @transform_0, window_bounds = array<i64: 16, 128>}, {transform_indices = @transform_1, window_bounds = array<i64: 128, 128>}, {transform_indices = @transform_2, window_bounds = array<i64: 1, 128>}, {transform_indices = @transform_3, window_bounds = array<i64: 128, 128>}, {transform_indices = @transform_4, window_bounds = array<i64: 128, 128>}, {pipeline_mode = #tpu.pipeline_mode<synchronous>, transform_indices = @transform_5, window_bounds = array<i64: 128, 128>}, {transform_indices = @transform_6, window_bounds = array<i64: 1, 128>}, {transform_indices = @transform_7, window_bounds = array<i64: 16, 128>}]} {
    %c0_i32 = arith.constant 0 : i32
    %0 = arith.cmpi eq, %arg2, %c0_i32 : i32
    %1 = arith.extui %0 : i1 to i32
    %c0_i32_0 = arith.constant 0 : i32
    %2 = arith.cmpi ne, %1, %c0_i32_0 : i32
    scf.if %2 {
      %c0_15 = arith.constant 0 : index
      %c0_16 = arith.constant 0 : index
      %20 = vector.load %arg5[%c0_15, %c0_16] : memref<1x128xf32, #tpu.memory_space<vmem>>, vector<1x128xf32>
      %21 = vector.shape_cast %20 : vector<1x128xf32> to vector<1x128xf32>
      %22 = vector.broadcast %21 : vector<1x128xf32> to vector<16x128xf32>
      %c0_17 = arith.constant 0 : index
      %c0_18 = arith.constant 0 : index
      %23 = vector.load %arg11[%c0_17, %c0_18] : memref<16x128xf32, #tpu.memory_space<vmem>>, vector<16x128xf32>
      tpu.vector_store %arg11[%c0_17, %c0_18], %22 {strides = array<i32>} : memref<16x128xf32, #tpu.memory_space<vmem>>, vector<16x128xf32>,
    } else {
    }
    %c0_i32_1 = arith.constant 0 : i32
    %3 = arith.cmpi eq, %arg2, %c0_i32_1 : i32
    %c0_i32_2 = arith.constant 0 : i32
    %4 = arith.cmpi eq, %arg1, %c0_i32_2 : i32
    %5 = arith.andi %3, %4 : i1
    %6 = arith.extui %5 : i1 to i32
    %c0_i32_3 = arith.constant 0 : i32
    %7 = arith.cmpi ne, %6, %c0_i32_3 : i32
    scf.if %7 {
      %cst_15 = arith.constant 0.000000e+00 : f32
      %20 = vector.broadcast %cst_15 : f32 to vector<16x128xf32>
      %c0_16 = arith.constant 0 : index
      %c0_17 = arith.constant 0 : index
      %21 = vector.load %arg12[%c0_16, %c0_17] : memref<16x128xf32, #tpu.memory_space<vmem>>, vector<16x128xf32>
      tpu.vector_store %arg12[%c0_16, %c0_17], %20 {strides = array<i32>} : memref<16x128xf32, #tpu.memory_space<vmem>>, vector<16x128xf32>,
    } else {
    }
    %c0 = arith.constant 0 : index
    %c0_4 = arith.constant 0 : index
    %8 = vector.load %arg3[%c0, %c0_4] : memref<16x128xbf16, #tpu.memory_space<vmem>>, vector<16x128xbf16>
    %c0_5 = arith.constant 0 : index
    %c0_6 = arith.constant 0 : index
    %9 = vector.load %arg11[%c0_5, %c0_6] : memref<16x128xf32, #tpu.memory_space<vmem>>, vector<16x128xf32>
    %c0_7 = arith.constant 0 : index
    %c0_8 = arith.constant 0 : index
    %10 = vector.load %arg4[%c0_7, %c0_8] : memref<128x128xbf16, #tpu.memory_space<vmem>>, vector<128x128xbf16>
    %cst = arith.constant dense<0.000000e+00> : vector<16x128xf32>
    %11 = tpu.matmul %8, %10, %cst {dimension_numbers = #tpu.dot_dimension_numbers<[1], [1], [0], [0], [0, 0, 1, 0], [], []>} : vector<16x128xbf16>, vector<128x128xbf16>, vector<16x128xf32> -> vector<16x128xf32>
    %12 = arith.addf %9, %11 : vector<16x128xf32>
    %c0_9 = arith.constant 0 : index
    %c0_10 = arith.constant 0 : index
    %13 = vector.load %arg11[%c0_9, %c0_10] : memref<16x128xf32, #tpu.memory_space<vmem>>, vector<16x128xf32>
    tpu.vector_store %arg11[%c0_9, %c0_10], %12 {strides = array<i32>} : memref<16x128xf32, #tpu.memory_space<vmem>>, vector<16x128xf32>,
    %c0_i32_11 = arith.constant 0 : i32
    %14 = arith.cmpi eq, %arg1, %c0_i32_11 : i32
    %15 = arith.extui %14 : i1 to i32
    %c0_i32_12 = arith.constant 0 : i32
    %16 = arith.cmpi ne, %15, %c0_i32_12 : i32
    scf.if %16 {
      %c0_15 = arith.constant 0 : index
      %c0_16 = arith.constant 0 : index
      %20 = vector.load %arg12[%c0_15, %c0_16] : memref<16x128xf32, #tpu.memory_space<vmem>>, vector<16x128xf32>
      %c0_17 = arith.constant 0 : index
      %c0_18 = arith.constant 0 : index
      %21 = vector.load %arg6[%c0_17, %c0_18] : memref<128x128xbf16, #tpu.memory_space<vmem>>, vector<128x128xbf16>
      %cst_19 = arith.constant dense<0.000000e+00> : vector<16x128xf32>
      %22 = tpu.matmul %8, %21, %cst_19 {dimension_numbers = #tpu.dot_dimension_numbers<[1], [0], [0], [1], [0, 0, 1, 1], [], []>} : vector<16x128xbf16>, vector<128x128xbf16>, vector<16x128xf32> -> vector<16x128xf32>
      %23 = arith.addf %20, %22 : vector<16x128xf32>
      %c0_20 = arith.constant 0 : index
      %c0_21 = arith.constant 0 : index
      %24 = vector.load %arg12[%c0_20, %c0_21] : memref<16x128xf32, #tpu.memory_space<vmem>>, vector<16x128xf32>
      tpu.vector_store %arg12[%c0_20, %c0_21], %23 {strides = array<i32>} : memref<16x128xf32, #tpu.memory_space<vmem>>, vector<16x128xf32>,
    } else {
    }
    %c0_i32_13 = arith.constant 0 : i32
    %17 = arith.cmpi eq, %arg2, %c0_i32_13 : i32
    %18 = arith.extui %17 : i1 to i32
    %c0_i32_14 = arith.constant 0 : i32
    %19 = arith.cmpi ne, %18, %c0_i32_14 : i32
    scf.if %19 {
      %c0_i32_15 = arith.constant 0 : i32
      %20 = arith.cmpi eq, %arg1, %c0_i32_15 : i32
      %21 = arith.extui %20 : i1 to i32
      %c0_i32_16 = arith.constant 0 : i32
      %22 = arith.cmpi ne, %21, %c0_i32_16 : i32
      scf.if %22 {
        %c0_28 = arith.constant 0 : index
        %c0_29 = arith.constant 0 : index
        %32 = vector.load %arg12[%c0_28, %c0_29] : memref<16x128xf32, #tpu.memory_space<vmem>>, vector<16x128xf32>
        %c0_30 = arith.constant 0 : index
        %c0_31 = arith.constant 0 : index
        %33 = vector.load %arg8[%c0_30, %c0_31] : memref<128x128xf32, #tpu.memory_space<vmem>>, vector<128x128xf32>
        %cst_32 = arith.constant dense<0.000000e+00> : vector<16x128xf32>
        %34 = tpu.matmul %32, %33, %cst_32 {dimension_numbers = #tpu.dot_dimension_numbers<[1], [0], [0], [1], [0, 0, 1, 1], [], []>} : vector<16x128xf32>, vector<128x128xf32>, vector<16x128xf32> -> vector<16x128xf32>
        %35 = arith.mulf %34, %32 : vector<16x128xf32>
        %cst_33 = arith.constant dense<0.000000e+00> : vector<16xf32>
        %36 = vector.multi_reduction <add>, %35, %cst_33 [1] : vector<16x128xf32> to vector<16xf32>
        %37 = vector.shape_cast %36 : vector<16xf32> to vector<16x1xf32>
        %cst_34 = arith.constant 0.000000e+00 : f32
        %38 = vector.broadcast %cst_34 : f32 to vector<16x1xf32>
        %39 = arith.maximumf %37, %38 : vector<16x1xf32>
        %40 = math.sqrt %39 : vector<16x1xf32>
        %cst_35 = arith.constant 9.99999971E-10 : f32
        %41 = vector.broadcast %cst_35 : f32 to vector<16x1xf32>
        %42 = arith.addf %40, %41 : vector<16x1xf32>
        %43 = tpu.reciprocal %42 {approx = true} : vector<16x1xf32> -> vector<16x1xf32>
        %cst_36 = arith.constant 2.000000e+00 : f32
        %44 = vector.broadcast %cst_36 : f32 to vector<16x1xf32>
        %45 = arith.mulf %44, %43 : vector<16x1xf32>
        %46 = vector.broadcast %45 : vector<16x1xf32> to vector<16x128xf32>
        %47 = arith.mulf %46, %32 : vector<16x128xf32>
        %48 = arith.truncf %47 : vector<16x128xf32> to vector<16x128xbf16>
        %c0_37 = arith.constant 0 : index
        %c0_38 = arith.constant 0 : index
        %49 = vector.load %arg13[%c0_37, %c0_38] : memref<16x128xbf16, #tpu.memory_space<vmem>>, vector<16x128xbf16>
        tpu.vector_store %arg13[%c0_37, %c0_38], %48 {strides = array<i32>} : memref<16x128xbf16, #tpu.memory_space<vmem>>, vector<16x128xbf16>,
      } else {
      }
      %c0_17 = arith.constant 0 : index
      %c0_18 = arith.constant 0 : index
      %23 = vector.load %arg13[%c0_17, %c0_18] : memref<16x128xbf16, #tpu.memory_space<vmem>>, vector<16x128xbf16>
      %c0_19 = arith.constant 0 : index
      %c0_20 = arith.constant 0 : index
      %24 = vector.load %arg7[%c0_19, %c0_20] : memref<128x128xbf16, #tpu.memory_space<vmem>>, vector<128x128xbf16>
      %cst_21 = arith.constant dense<0.000000e+00> : vector<16x128xf32>
      %25 = tpu.matmul %23, %24, %cst_21 {dimension_numbers = #tpu.dot_dimension_numbers<[1], [0], [0], [1], [0, 0, 1, 1], [], []>} : vector<16x128xbf16>, vector<128x128xbf16>, vector<16x128xf32> -> vector<16x128xf32>
      %c0_22 = arith.constant 0 : index
      %c0_23 = arith.constant 0 : index
      %26 = vector.load %arg11[%c0_22, %c0_23] : memref<16x128xf32, #tpu.memory_space<vmem>>, vector<16x128xf32>
      %c0_24 = arith.constant 0 : index
      %c0_25 = arith.constant 0 : index
      %27 = vector.load %arg9[%c0_24, %c0_25] : memref<1x128xf32, #tpu.memory_space<vmem>>, vector<1x128xf32>
      %28 = vector.broadcast %27 : vector<1x128xf32> to vector<16x128xf32>
      %29 = arith.mulf %28, %25 : vector<16x128xf32>
      %30 = arith.addf %26, %29 : vector<16x128xf32>
      %c0_26 = arith.constant 0 : index
      %c0_27 = arith.constant 0 : index
      %31 = vector.load %arg10[%c0_26, %c0_27] : memref<16x128xf32, #tpu.memory_space<vmem>>, vector<16x128xf32>
      tpu.vector_store %arg10[%c0_26, %c0_27], %30 {strides = array<i32>} : memref<16x128xf32, #tpu.memory_space<vmem>>, vector<16x128xf32>,
    } else {
    }
    return
  }
  func.func @transform_0(%arg0: i32, %arg1: i32, %arg2: i32) -> (i32, i32) {
    %c0_i32 = arith.constant 0 : i32
    return %arg0, %arg2 : i32, i32
  }
  func.func @transform_1(%arg0: i32, %arg1: i32, %arg2: i32) -> (i32, i32) {
    %c0_i32 = arith.constant 0 : i32
    return %arg1, %arg2 : i32, i32
  }
  func.func @transform_2(%arg0: i32, %arg1: i32, %arg2: i32) -> (i32, i32) {
    %c0_i32 = arith.constant 0 : i32
    %c0_i32_0 = arith.constant 0 : i32
    return %c0_i32, %arg1 : i32, i32
  }
  func.func @transform_3(%arg0: i32, %arg1: i32, %arg2: i32) -> (i32, i32) {
    %c0_i32 = arith.constant 0 : i32
    %0 = arith.cmpi eq, %arg1, %c0_i32 : i32
    %c0_i32_0 = arith.constant 0 : i32
    %1 = arith.select %0, %arg2, %c0_i32_0 : i32
    %c0_i32_1 = arith.constant 0 : i32
    %c0_i32_2 = arith.constant 0 : i32
    return %1, %c0_i32_1 : i32, i32
  }
  func.func @transform_4(%arg0: i32, %arg1: i32, %arg2: i32) -> (i32, i32) {
    %c0_i32 = arith.constant 0 : i32
    %c0_i32_0 = arith.constant 0 : i32
    return %c0_i32, %arg1 : i32, i32
  }
  func.func @transform_5(%arg0: i32, %arg1: i32, %arg2: i32) -> (i32, i32) {
    %c0_i32 = arith.constant 0 : i32
    %c0_i32_0 = arith.constant 0 : i32
    %c0_i32_1 = arith.constant 0 : i32
    return %c0_i32, %c0_i32_0 : i32, i32
  }
  func.func @transform_6(%arg0: i32, %arg1: i32, %arg2: i32) -> (i32, i32) {
    %c0_i32 = arith.constant 0 : i32
    %c0_i32_0 = arith.constant 0 : i32
    return %c0_i32, %arg1 : i32, i32
  }
  func.func @transform_7(%arg0: i32, %arg1: i32, %arg2: i32) -> (i32, i32) {
    %c0_i32 = arith.constant 0 : i32
    return %arg0, %arg1 : i32, i32
  }
}

</mosaic_0001>

<llo_original>
// kernel: tpu_custom_call.1
$region0: #{tpu_custom_call.1}
  #allocation0 [shape = 'u32[]', space=smem, size = 0x4, offset = 0x4, fixed_abs, tag = 'smem constant byte address 0x4 - core index']
  #allocation1 [shape = 'u32[72,128]{1,0:T(1,128)}', space=vmem, size = 0x9000, scoped, tag = 'internal scratch']
  #allocation2 [shape = 'f32[16,128]{1,0:T(8,128)}', space=vmem, size = 0x2000, scoped, tag = 'scratch operand']
  #allocation3 [shape = 'f32[16,128]{1,0:T(8,128)}', space=vmem, size = 0x2000, scoped, tag = 'scratch operand']
  #allocation4 [shape = 'bf16[16,128]{1,0:T(8,128)(2,1)}', space=vmem, size = 0x1000, scoped, tag = 'scratch operand']
  %s0 = inlined_call_operand.hbm [shape: bf16[16,128], index: 0, kind: input, shape index: {}]
  %s1 = inlined_call_operand.hbm [shape: bf16[128,128], index: 1, kind: input, shape index: {}]
  %s2 = inlined_call_operand.vmem [shape: f32[1,128], index: 2, kind: input, shape index: {}]
  %s3 = inlined_call_operand.hbm [shape: bf16[128,128], index: 3, kind: input, shape index: {}]
  %s4 = inlined_call_operand.hbm [shape: bf16[128,128], index: 4, kind: input, shape index: {}]
  %s5 = inlined_call_operand.hbm [shape: f32[128,128], index: 5, kind: input, shape index: {}]
  %s6 = inlined_call_operand.vmem [shape: f32[1,128], index: 6, kind: input, shape index: {}]
  %s7 = inlined_call_operand.hbm [shape: f32[16,128], index: 7, kind: output, shape index: {}]
  %s8 = sld [smem:[#allocation0]]
  $region78: #{tpu_custom_call.1} parent=0
    _
  %s10 = ssub.s32 1, %s8
  %s11 = scalar_select 0, %s10, %s8
  $region1: #{tpu_custom_call.1} parent=0
    #allocation5 [shape = 'u8[4096]{0}', space=vmem, size = 0x1000, scoped, tag = 'input window, operand 0, single buffered']
    #allocation6 [shape = 's32[1]{0}', space=sflag, size = 0x4, scoped, tag = 'scoped memory for tpu_custom_call.1']
    #allocation7 [shape = 's32[1]{0}', space=sflag, size = 0x4, scoped, tag = 'scoped memory for tpu_custom_call.1']
    #allocation8 [shape = 'u8[32768]{0}', space=vmem, size = 0x8000, scoped, tag = 'input window, operand 1, single buffered']
    #allocation9 [shape = 's32[1]{0}', space=sflag, size = 0x4, scoped, tag = 'scoped memory for tpu_custom_call.1']
    #allocation10 [shape = 'u8[32768]{0}', space=vmem, size = 0x8000, scoped, tag = 'input window, operand 3, single buffered']
    #allocation11 [shape = 'u8[32768]{0}', space=vmem, size = 0x8000, scoped, tag = 'input window, operand 4, single buffered']
    #allocation12 [shape = 's32[1]{0}', space=sflag, size = 0x4, scoped, tag = 'scoped memory for tpu_custom_call.1']
    #allocation13 [shape = 'u8[65536]{0}', space=vmem, size = 0x10000, scoped, tag = 'input window, operand 5, single buffered']
    #allocation14 [shape = 'u8[8192]{0}', space=vmem, size = 0x2000, scoped, tag = 'output window, operand 0, single buffered']
    %12 = vsyncpa [#allocation6], 0
    %13 = vsyncpa [#allocation9], 0
    %14 = vsyncpa [#allocation12], 0
    %15 = vsyncpa [#allocation7], 0
    // Predicated region
    $region2: #{tpu_custom_call.1} parent=1 // pred_check
      _
    $region3: #{tpu_custom_call.1} parent=1 // pred_check_branch
      %17 = sbr.rel (0) target = $region5
    $region4: #{tpu_custom_call.1} parent=1 // pred_region
      %19 = vsyncadd [#allocation6], 0
      %s20 = sshll.u32 %s0, 4
      %s21 = int_to_ptr.hbm [resolvable:$true] %s20
      %s22 = sshll.u32 [#allocation5], 4
      %s23 = int_to_ptr.vmem [resolvable:$true] %s22
      %28 = dma.hbm_to_vmem [thread:$0]  %s21, 128, %s23, [#allocation6], 64, 64, 4
    $region5: #{tpu_custom_call.1} parent=1 // pred_fallthru
      _
    // Predicated region
    $region6: #{tpu_custom_call.1} parent=1 // pred_check
      _
    $region7: #{tpu_custom_call.1} parent=1 // pred_check_branch
      %30 = sbr.rel (0) target = $region9
    $region8: #{tpu_custom_call.1} parent=1 // pred_region
      %32 = vsyncadd [#allocation9], 0
      %s33 = sshll.u32 %s1, 4
      %s34 = int_to_ptr.hbm [resolvable:$true] %s33
      %s35 = sshll.u32 [#allocation8], 4
      %s36 = int_to_ptr.vmem [resolvable:$true] %s35
      %41 = dma.hbm_to_vmem [thread:$0]  %s34, 1024, %s36, [#allocation9], 64, 64, 4
    $region9: #{tpu_custom_call.1} parent=1 // pred_fallthru
      _
    // Predicated region
    $region10: #{tpu_custom_call.1} parent=1 // pred_check
      _
    $region11: #{tpu_custom_call.1} parent=1 // pred_check_branch
      %43 = sbr.rel (0) target = $region13
    $region12: #{tpu_custom_call.1} parent=1 // pred_region
      _
    $region13: #{tpu_custom_call.1} parent=1 // pred_fallthru
      _
    // Predicated region
    $region14: #{tpu_custom_call.1} parent=1 // pred_check
      _
    $region15: #{tpu_custom_call.1} parent=1 // pred_check_branch
      %45 = sbr.rel (0) target = $region17
    $region16: #{tpu_custom_call.1} parent=1 // pred_region
      %p46 = scmp.eq.s32.totalorder 0, 0
      %s47 = scalar_select %p46, 0, 0
      %s48 = smul.u32 16, %s47
      %50 = vsyncadd [#allocation9], 0
      %s51 = smul.addr %s48, 4
      %s52 = scalar_lea.hbm %s3, %s51
      %s53 = sshll.u32 %s52, 4
      %s54 = int_to_ptr.hbm [resolvable:$true] %s53
      %s55 = sshll.u32 [#allocation10], 4
      %s56 = int_to_ptr.vmem [resolvable:$true] %s55
      %61 = dma.hbm_to_vmem [thread:$0]  %s54, 1024, %s56, [#allocation9], 64, 64, 4
    $region17: #{tpu_custom_call.1} parent=1 // pred_fallthru
      _
    // Predicated region
    $region18: #{tpu_custom_call.1} parent=1 // pred_check
      _
    $region19: #{tpu_custom_call.1} parent=1 // pred_check_branch
      %63 = sbr.rel (0) target = $region21
    $region20: #{tpu_custom_call.1} parent=1 // pred_region
      %65 = vsyncadd [#allocation12], 0
      %s66 = sshll.u32 %s4, 4
      %s67 = int_to_ptr.hbm [resolvable:$true] %s66
      %s68 = sshll.u32 [#allocation11], 4
      %s69 = int_to_ptr.vmem [resolvable:$true] %s68
      %74 = dma.hbm_to_vmem [thread:$0]  %s67, 1024, %s69, [#allocation12], 64, 64, 4
    $region21: #{tpu_custom_call.1} parent=1 // pred_fallthru
      _
    // Predicated region
    $region22: #{tpu_custom_call.1} parent=1 // pred_check
      _
    $region23: #{tpu_custom_call.1} parent=1 // pred_check_branch
      %76 = sbr.rel (0) target = $region25
    $region24: #{tpu_custom_call.1} parent=1 // pred_region
      %78 = vsyncadd [#allocation12], 0
      %s79 = sshll.u32 %s5, 4
      %s80 = int_to_ptr.hbm [resolvable:$true] %s79
      %s81 = sshll.u32 [#allocation13], 4
      %s82 = int_to_ptr.vmem [resolvable:$true] %s81
      %87 = dma.hbm_to_vmem [thread:$0]  %s80, 2048, %s82, [#allocation12], 128, 128, 8
    $region25: #{tpu_custom_call.1} parent=1 // pred_fallthru
      _
    // Predicated region
    $region26: #{tpu_custom_call.1} parent=1 // pred_check
      _
    $region27: #{tpu_custom_call.1} parent=1 // pred_check_branch
      %89 = sbr.rel (0) target = $region29
    $region28: #{tpu_custom_call.1} parent=1 // pred_region
      _
    $region29: #{tpu_custom_call.1} parent=1 // pred_fallthru
      _
    // Predicated region
    $region30: #{tpu_custom_call.1} parent=1 // pred_check
      _
    $region31: #{tpu_custom_call.1} parent=1 // pred_check_branch
      %91 = sbr.rel (0) target = $region33
    $region32: #{tpu_custom_call.1} parent=1 // pred_region
      %93 = dma.done [#allocation6], 128
    $region33: #{tpu_custom_call.1} parent=1 // pred_fallthru
      _
    // Predicated region
    $region34: #{tpu_custom_call.1} parent=1 // pred_check
      _
    $region35: #{tpu_custom_call.1} parent=1 // pred_check_branch
      %95 = sbr.rel (0) target = $region37
    $region36: #{tpu_custom_call.1} parent=1 // pred_region
      %97 = dma.done [#allocation9], 1024
    $region37: #{tpu_custom_call.1} parent=1 // pred_fallthru
      _
    // Predicated region
    $region38: #{tpu_custom_call.1} parent=1 // pred_check
      _
    $region39: #{tpu_custom_call.1} parent=1 // pred_check_branch
      %99 = sbr.rel (0) target = $region41
    $region40: #{tpu_custom_call.1} parent=1 // pred_region
      %101 = dma.done [#allocation9], 1024
    $region41: #{tpu_custom_call.1} parent=1 // pred_fallthru
      _
    // Predicated region
    $region42: #{tpu_custom_call.1} parent=1 // pred_check
      _
    $region43: #{tpu_custom_call.1} parent=1 // pred_check_branch
      %103 = sbr.rel (0) target = $region45
    $region44: #{tpu_custom_call.1} parent=1 // pred_region
      %105 = dma.done [#allocation12], 1024
    $region45: #{tpu_custom_call.1} parent=1 // pred_fallthru
      _
    // Predicated region
    $region46: #{tpu_custom_call.1} parent=1 // pred_check
      _
    $region47: #{tpu_custom_call.1} parent=1 // pred_check_branch
      %107 = sbr.rel (0) target = $region49
    $region48: #{tpu_custom_call.1} parent=1 // pred_region
      %109 = dma.done [#allocation12], 2048
    $region49: #{tpu_custom_call.1} parent=1 // pred_fallthru
      _
    %p110 = scmp.eq.s32.totalorder 0, 0
    %s111 = scalar_select %p110, 0, 0
    %s112 = smul.u32 16, %s111
    %p113 = scmp.eq.s32.totalorder 0, 0
    // Predicated region
    $region50: #{tpu_custom_call.1} parent=1 // pred_check
      %p114 = pneg %p113
    $region51: #{tpu_custom_call.1} parent=1 // pred_check_branch
      %116 = sbr.rel (%p114) target = $region53
    $region52: #{tpu_custom_call.1} parent=1 // pred_region
      %v117 = vld [vmem:[%s2] sm:$0x1]
      %v119 = vperm.slane %v117, 0
      %121 = vst [vmem:[#allocation2] sm:$0xff] %v119
      %122 = vst [vmem:[#allocation2 + $0x8] sm:$0xff] %v119
    $region53: #{tpu_custom_call.1} parent=1 // pred_fallthru
      _
    %p123 = scmp.eq.s32.totalorder 0, 0
    %p124 = pnand %p113, %p123
    %p125 = pneg %p124
    // Predicated region
    $region54: #{tpu_custom_call.1} parent=1 // pred_check
      _
    $region55: #{tpu_custom_call.1} parent=1 // pred_check_branch
      %127 = sbr.rel (%p124) target = $region57
    $region56: #{tpu_custom_call.1} parent=1 // pred_region
      %128 = vst [vmem:[#allocation3] sm:$0xff] 0.0
      %129 = vst [vmem:[#allocation3 + $0x8] sm:$0xff] 0.0
    $region57: #{tpu_custom_call.1} parent=1 // pred_fallthru
      _
    %v130 = vld [vmem:[#allocation5] sm:$0xf]
    %v131 = vld [vmem:[#allocation5 + $0x4] sm:$0xf]
    %v132 = vld [vmem:[#allocation2] sm:$0xff]
    %v133 = vld [vmem:[#allocation2 + $0x8] sm:$0xff]
    %v134 = vld [vmem:[#allocation8] sm:$0xf]
    %v135 = vld [vmem:[#allocation8 + $0x4] sm:$0xf]
    %v136 = vld [vmem:[#allocation8 + $0x8] sm:$0xf]
    %v137 = vld [vmem:[#allocation8 + $0xc] sm:$0xf]
    %v138 = vld [vmem:[#allocation8 + $0x10] sm:$0xf]
    %v139 = vld [vmem:[#allocation8 + $0x14] sm:$0xf]
    %v140 = vld [vmem:[#allocation8 + $0x18] sm:$0xf]
    %v141 = vld [vmem:[#allocation8 + $0x1c] sm:$0xf]
    %v142 = vld [vmem:[#allocation8 + $0x20] sm:$0xf]
    %v143 = vld [vmem:[#allocation8 + $0x24] sm:$0xf]
    %v144 = vld [vmem:[#allocation8 + $0x28] sm:$0xf]
    %v145 = vld [vmem:[#allocation8 + $0x2c] sm:$0xf]
    %v146 = vld [vmem:[#allocation8 + $0x30] sm:$0xf]
    %v147 = vld [vmem:[#allocation8 + $0x34] sm:$0xf]
    %v148 = vld [vmem:[#allocation8 + $0x38] sm:$0xf]
    %v149 = vld [vmem:[#allocation8 + $0x3c] sm:$0xf]
    %v152 = vunpack.c.l.b16 %v130
    %v153 = vunpack.c.l.b16 %v131
    %v154 = vpack.c.b16 %v153, %v152
    %v172 = vunpack.c.l.b16 %v134
    %v173 = vunpack.c.l.b16 %v135
    %v174 = vunpack.c.l.b16 %v136
    %v175 = vunpack.c.l.b16 %v137
    %v176 = vunpack.c.l.b16 %v138
    %v177 = vunpack.c.l.b16 %v139
    %v178 = vunpack.c.l.b16 %v140
    %v179 = vunpack.c.l.b16 %v141
    %v180 = vunpack.c.l.b16 %v142
    %v181 = vunpack.c.l.b16 %v143
    %v182 = vunpack.c.l.b16 %v144
    %v183 = vunpack.c.l.b16 %v145
    %v184 = vunpack.c.l.b16 %v146
    %v185 = vunpack.c.l.b16 %v147
    %v186 = vunpack.c.l.b16 %v148
    %v187 = vunpack.c.l.b16 %v149
    %v188 = vpack.c.b16 %v173, %v172
    %v189 = vpack.c.b16 %v175, %v174
    %v190 = vpack.c.b16 %v177, %v176
    %v191 = vpack.c.b16 %v179, %v178
    %v192 = vpack.c.b16 %v181, %v180
    %v193 = vpack.c.b16 %v183, %v182
    %v194 = vpack.c.b16 %v185, %v184
    %v195 = vpack.c.b16 %v187, %v186
    %204 = vmatpush.bf16.xpose.msra.mxu0 %v195
    %205 = vmatpush.bf16.xpose.msra.mxu0 %v194
    %206 = vmatpush.bf16.xpose.msra.mxu0 %v193
    %207 = vmatpush.bf16.xpose.msra.mxu0 %v192
    %208 = vmatpush.bf16.xpose.msra.mxu0 %v191
    %209 = vmatpush.bf16.xpose.msra.mxu0 %v190
    %210 = vmatpush.bf16.xpose.msra.mxu0 %v189
    %211 = vmatpush.bf16.xpose.msra.mxu0 %v188
    %212 = vmatmul.bf16.gmra.mxu0 %v154
    %v213 = vpop.f32.mrf.mxu0
    %v214 = vadd.f32 0.0, %v213
    %v215 = vpop.f32.mrf.mxu0
    %v216 = vadd.f32 0.0, %v215
    %217 = vdwg.mxu0
    %v218 = vadd.f32 %v132, %v214
    %v219 = vadd.f32 %v133, %v216
    %220 = vst [vmem:[#allocation2] sm:$0xff] %v218
    %221 = vst [vmem:[#allocation2 + $0x8] sm:$0xff] %v219
    // Predicated region
    $region58: #{tpu_custom_call.1} parent=1 // pred_check
      %p222 = pneg %p123
    $region59: #{tpu_custom_call.1} parent=1 // pred_check_branch
      %224 = sbr.rel (%p222) target = $region61
    $region60: #{tpu_custom_call.1} parent=1 // pred_region
      %v225 = vld [vmem:[#allocation3] sm:$0xff]
      %v226 = vld [vmem:[#allocation3 + $0x8] sm:$0xff]
      %v227 = vld [vmem:[#allocation10] sm:$0xf]
      %v228 = vld [vmem:[#allocation10 + $0x4] sm:$0xf]
      %v229 = vld [vmem:[#allocation10 + $0x8] sm:$0xf]
      %v230 = vld [vmem:[#allocation10 + $0xc] sm:$0xf]
      %v231 = vld [vmem:[#allocation10 + $0x10] sm:$0xf]
      %v232 = vld [vmem:[#allocation10 + $0x14] sm:$0xf]
      %v233 = vld [vmem:[#allocation10 + $0x18] sm:$0xf]
      %v234 = vld [vmem:[#allocation10 + $0x1c] sm:$0xf]
      %v235 = vld [vmem:[#allocation10 + $0x20] sm:$0xf]
      %v236 = vld [vmem:[#allocation10 + $0x24] sm:$0xf]
      %v237 = vld [vmem:[#allocation10 + $0x28] sm:$0xf]
      %v238 = vld [vmem:[#allocation10 + $0x2c] sm:$0xf]
      %v239 = vld [vmem:[#allocation10 + $0x30] sm:$0xf]
      %v240 = vld [vmem:[#allocation10 + $0x34] sm:$0xf]
      %v241 = vld [vmem:[#allocation10 + $0x38] sm:$0xf]
      %v242 = vld [vmem:[#allocation10 + $0x3c] sm:$0xf]
      %v259 = vunpack.c.l.b16 %v227
      %v260 = vunpack.c.l.b16 %v228
      %v261 = vunpack.c.l.b16 %v229
      %v262 = vunpack.c.l.b16 %v230
      %v263 = vunpack.c.l.b16 %v231
      %v264 = vunpack.c.l.b16 %v232
      %v265 = vunpack.c.l.b16 %v233
      %v266 = vunpack.c.l.b16 %v234
      %v267 = vunpack.c.l.b16 %v235
      %v268 = vunpack.c.l.b16 %v236
      %v269 = vunpack.c.l.b16 %v237
      %v270 = vunpack.c.l.b16 %v238
      %v271 = vunpack.c.l.b16 %v239
      %v272 = vunpack.c.l.b16 %v240
      %v273 = vunpack.c.l.b16 %v241
      %v274 = vunpack.c.l.b16 %v242
      %v275 = vpack.c.b16 %v260, %v259
      %v276 = vpack.c.b16 %v262, %v261
      %v277 = vpack.c.b16 %v264, %v263
      %v278 = vpack.c.b16 %v266, %v265
      %v279 = vpack.c.b16 %v268, %v267
      %v280 = vpack.c.b16 %v270, %v269
      %v281 = vpack.c.b16 %v272, %v271
      %v282 = vpack.c.b16 %v274, %v273
      %291 = vmatpush.bf16.msra.mxu0 %v282
      %292 = vmatpush.bf16.msra.mxu0 %v281
      %293 = vmatpush.bf16.msra.mxu0 %v280
      %294 = vmatpush.bf16.msra.mxu0 %v279
      %295 = vmatpush.bf16.msra.mxu0 %v278
      %296 = vmatpush.bf16.msra.mxu0 %v277
      %297 = vmatpush.bf16.msra.mxu0 %v276
      %298 = vmatpush.bf16.msra.mxu0 %v275
      %299 = vmatmul.bf16.gmra.mxu0 %v154
      %v300 = vpop.f32.mrf.mxu0
      %v301 = vadd.f32 0.0, %v300
      %v302 = vpop.f32.mrf.mxu0
      %v303 = vadd.f32 0.0, %v302
      %304 = vdwg.mxu0
      %v305 = vadd.f32 %v225, %v301
      %v306 = vadd.f32 %v226, %v303
      %307 = vst [vmem:[#allocation3] sm:$0xff] %v305
      %308 = vst [vmem:[#allocation3 + $0x8] sm:$0xff] %v306
    $region61: #{tpu_custom_call.1} parent=1 // pred_fallthru
      _
    // Predicated region
    $region62: #{tpu_custom_call.1} parent=1 // pred_check
      %p309 = pneg %p113
    $region63: #{tpu_custom_call.1} parent=1 // pred_check_branch
      %311 = sbr.rel (%p309) target = $region65
    $region64: #{tpu_custom_call.1} parent=1 // pred_region
      // Predicated region
      $region66: #{tpu_custom_call.1} parent=64 // pred_check
        %p312 = pneg %p123
      $region67: #{tpu_custom_call.1} parent=64 // pred_check_branch
        %314 = sbr.rel (%p312) target = $region69
      $region68: #{tpu_custom_call.1} parent=64 // pred_region
        %v315 = vld [vmem:[#allocation3] sm:$0xff]
        %v316 = vld [vmem:[#allocation3 + $0x8] sm:$0xff]
        %v317 = vld [vmem:[#allocation13] sm:$0xff]
        %v318 = vld [vmem:[#allocation13 + $0x8] sm:$0xff]
        %v319 = vld [vmem:[#allocation13 + $0x10] sm:$0xff]
        %v320 = vld [vmem:[#allocation13 + $0x18] sm:$0xff]
        %v321 = vld [vmem:[#allocation13 + $0x20] sm:$0xff]
        %v322 = vld [vmem:[#allocation13 + $0x28] sm:$0xff]
        %v323 = vld [vmem:[#allocation13 + $0x30] sm:$0xff]
        %v324 = vld [vmem:[#allocation13 + $0x38] sm:$0xff]
        %v325 = vld [vmem:[#allocation13 + $0x40] sm:$0xff]
        %v326 = vld [vmem:[#allocation13 + $0x48] sm:$0xff]
        %v327 = vld [vmem:[#allocation13 + $0x50] sm:$0xff]
        %v328 = vld [vmem:[#allocation13 + $0x58] sm:$0xff]
        %v329 = vld [vmem:[#allocation13 + $0x60] sm:$0xff]
        %v330 = vld [vmem:[#allocation13 + $0x68] sm:$0xff]
        %v331 = vld [vmem:[#allocation13 + $0x70] sm:$0xff]
        %v332 = vld [vmem:[#allocation13 + $0x78] sm:$0xff]
        %333 = vmatpush.msra.mxu0 %v332
        %334 = vmatpush.msra.mxu0 %v331
        %335 = vmatpush.msra.mxu0 %v330
        %336 = vmatpush.msra.mxu0 %v329
        %337 = vmatpush.msra.mxu0 %v328
        %338 = vmatpush.msra.mxu0 %v327
        %339 = vmatpush.msra.mxu0 %v326
        %340 = vmatpush.msra.mxu0 %v325
        %341 = vmatpush.msra.mxu0 %v324
        %342 = vmatpush.msra.mxu0 %v323
        %343 = vmatpush.msra.mxu0 %v322
        %344 = vmatpush.msra.mxu0 %v321
        %345 = vmatpush.msra.mxu0 %v320
        %346 = vmatpush.msra.mxu0 %v319
        %347 = vmatpush.msra.mxu0 %v318
        %348 = vmatpush.msra.mxu0 %v317
        %349 = vmatmul.f32.gmra.mxu0 %v315
        %v350 = vpop.f32.mrf.mxu0
        %v351 = vadd.f32 0.0, %v350
        %352 = vmatmul.f32.gmra.mxu0 %v316
        %v353 = vpop.f32.mrf.mxu0
        %v354 = vadd.f32 0.0, %v353
        %355 = vdwg.mxu0
        %v356 = vmul.f32 %v351, %v315
        %v357 = vmul.f32 %v354, %v316
        %358 = vadd.xlane.f32.xlu0 %v356
        %v359 = vpop.xlane.xlu0 %358
        %360 = vadd.xlane.f32.xlu0 %v357
        %v361 = vpop.xlane.xlu0 %360
        %v362 = vmax.f32 %v359, 0.0
        %v363 = vmax.f32 %v361, 0.0
        %v364 = vrsqrt.pop %v362
        %v365 = vmul.f32 %v364, %v362
        %v366 = vmul.f32 %v365, %v364
        %v367 = vmul.f32 0.5, %v366
        %v368 = vsub.f32 1.5, %v367
        %v369 = vmul.f32 %v364, %v368
        %v370 = vmul.f32 %v362, %v369
        %vm371 = vcmp.eq.f32.partialorder %v362, inf
        %v372 = vsel %vm371, %v362, %v370
        %vm373 = vcmp.eq.f32.partialorder %v362, 0.0
        %v374 = vand.u32 %v362, 2147483648
        %v375 = vsel %vm373, %v374, %v372
        %v376 = vrsqrt.pop %v363
        %v377 = vmul.f32 %v376, %v363
        %v378 = vmul.f32 %v377, %v376
        %v379 = vmul.f32 0.5, %v378
        %v380 = vsub.f32 1.5, %v379
        %v381 = vmul.f32 %v376, %v380
        %v382 = vmul.f32 %v363, %v381
        %vm383 = vcmp.eq.f32.partialorder %v363, inf
        %v384 = vsel %vm383, %v363, %v382
        %vm385 = vcmp.eq.f32.partialorder %v363, 0.0
        %v386 = vand.u32 %v363, 2147483648
        %v387 = vsel %vm385, %v386, %v384
        %v388 = vadd.f32 %v375, 1e-09
        %v389 = vadd.f32 %v387, 1e-09
        %v390 = vrcp.pop %v388
        %v391 = vrcp.pop %v389
        %v392 = vmul.f32 %v390, 2.0
        %v393 = vmul.f32 %v391, 2.0
        %v394 = vmul.f32 %v392, %v315
        %v395 = vmul.f32 %v393, %v316
        %v396 = vpack.c.bf16 %v394, %v394
        %v397 = vpack.c.bf16 %v395, %v395
        %398 = vst [vmem:[#allocation4] sm:$0xf] %v396
        %399 = vst [vmem:[#allocation4 + $0x4] sm:$0xf] %v397
      $region69: #{tpu_custom_call.1} parent=64 // pred_fallthru
        _
      %v400 = vld [vmem:[#allocation4] sm:$0xf]
      %v401 = vld [vmem:[#allocation4 + $0x4] sm:$0xf]
      %v402 = vld [vmem:[#allocation11] sm:$0xf]
      %v403 = vld [vmem:[#allocation11 + $0x4] sm:$0xf]
      %v404 = vld [vmem:[#allocation11 + $0x8] sm:$0xf]
      %v405 = vld [vmem:[#allocation11 + $0xc] sm:$0xf]
      %v406 = vld [vmem:[#allocation11 + $0x10] sm:$0xf]
      %v407 = vld [vmem:[#allocation11 + $0x14] sm:$0xf]
      %v408 = vld [vmem:[#allocation11 + $0x18] sm:$0xf]
      %v409 = vld [vmem:[#allocation11 + $0x1c] sm:$0xf]
      %v410 = vld [vmem:[#allocation11 + $0x20] sm:$0xf]
      %v411 = vld [vmem:[#allocation11 + $0x24] sm:$0xf]
      %v412 = vld [vmem:[#allocation11 + $0x28] sm:$0xf]
      %v413 = vld [vmem:[#allocation11 + $0x2c] sm:$0xf]
      %v414 = vld [vmem:[#allocation11 + $0x30] sm:$0xf]
      %v415 = vld [vmem:[#allocation11 + $0x34] sm:$0xf]
      %v416 = vld [vmem:[#allocation11 + $0x38] sm:$0xf]
      %v417 = vld [vmem:[#allocation11 + $0x3c] sm:$0xf]
      %v420 = vunpack.c.l.b16 %v400
      %v421 = vunpack.c.l.b16 %v401
      %v422 = vpack.c.b16 %v421, %v420
      %v440 = vunpack.c.l.b16 %v402
      %v441 = vunpack.c.l.b16 %v403
      %v442 = vunpack.c.l.b16 %v404
      %v443 = vunpack.c.l.b16 %v405
      %v444 = vunpack.c.l.b16 %v406
      %v445 = vunpack.c.l.b16 %v407
      %v446 = vunpack.c.l.b16 %v408
      %v447 = vunpack.c.l.b16 %v409
      %v448 = vunpack.c.l.b16 %v410
      %v449 = vunpack.c.l.b16 %v411
      %v450 = vunpack.c.l.b16 %v412
      %v451 = vunpack.c.l.b16 %v413
      %v452 = vunpack.c.l.b16 %v414
      %v453 = vunpack.c.l.b16 %v415
      %v454 = vunpack.c.l.b16 %v416
      %v455 = vunpack.c.l.b16 %v417
      %v456 = vpack.c.b16 %v441, %v440
      %v457 = vpack.c.b16 %v443, %v442
      %v458 = vpack.c.b16 %v445, %v444
      %v459 = vpack.c.b16 %v447, %v446
      %v460 = vpack.c.b16 %v449, %v448
      %v461 = vpack.c.b16 %v451, %v450
      %v462 = vpack.c.b16 %v453, %v452
      %v463 = vpack.c.b16 %v455, %v454
      %472 = vmatpush.bf16.msra.mxu0 %v463
      %473 = vmatpush.bf16.msra.mxu0 %v462
      %474 = vmatpush.bf16.msra.mxu0 %v461
      %475 = vmatpush.bf16.msra.mxu0 %v460
      %476 = vmatpush.bf16.msra.mxu0 %v459
      %477 = vmatpush.bf16.msra.mxu0 %v458
      %478 = vmatpush.bf16.msra.mxu0 %v457
      %479 = vmatpush.bf16.msra.mxu0 %v456
      %480 = vmatmul.bf16.gmra.mxu0 %v422
      %v481 = vpop.f32.mrf.mxu0
      %v482 = vadd.f32 0.0, %v481
      %v483 = vpop.f32.mrf.mxu0
      %v484 = vadd.f32 0.0, %v483
      %485 = vdwg.mxu0
      %v486 = vld [vmem:[#allocation2] sm:$0xff]
      %v487 = vld [vmem:[#allocation2 + $0x8] sm:$0xff]
      %v488 = vld [vmem:[%s6] sm:$0x1]
      %v490 = vperm.slane %v488, 0
      %v492 = vmul.f32 %v490, %v482
      %v493 = vmul.f32 %v490, %v484
      %v494 = vadd.f32 %v486, %v492
      %v495 = vadd.f32 %v487, %v493
      %496 = vst [vmem:[#allocation14] sm:$0xff] %v494
      %497 = vst [vmem:[#allocation14 + $0x8] sm:$0xff] %v495
    $region65: #{tpu_custom_call.1} parent=1 // pred_fallthru
      _
    // Predicated region
    $region70: #{tpu_custom_call.1} parent=1 // pred_check
      _
    $region71: #{tpu_custom_call.1} parent=1 // pred_check_branch
      %499 = sbr.rel (0) target = $region73
    $region72: #{tpu_custom_call.1} parent=1 // pred_region
      %501 = vsyncadd [#allocation7], 0
      %s502 = sshll.u32 [#allocation14], 4
      %s503 = int_to_ptr.vmem [resolvable:$true] %s502
      %s504 = sshll.u32 %s7, 4
      %s505 = int_to_ptr.hbm [resolvable:$true] %s504
      %510 = dma.vmem_to_hbm [thread:$0]  %s503, 256, %s505, [#allocation7], 128, 128, 8
    $region73: #{tpu_custom_call.1} parent=1 // pred_fallthru
      _
    // Predicated region
    $region74: #{tpu_custom_call.1} parent=1 // pred_check
      _
    $region75: #{tpu_custom_call.1} parent=1 // pred_check_branch
      %512 = sbr.rel (0) target = $region77
    $region76: #{tpu_custom_call.1} parent=1 // pred_region
      %514 = dma.done [#allocation7], 256
    $region77: #{tpu_custom_call.1} parent=1 // pred_fallthru
      _
    %515 = vsyncpa [#allocation6], 1
    %516 = vsyncpa [#allocation9], 1
    %517 = vsyncpa [#allocation12], 1
    %518 = vsyncpa [#allocation7], 1

</llo_original>
